<compile_context>
chip_gen: v7x
topology: tpu7x:2x2x1
jax: 0.10.0
libtpu: 0.0.40
codegen_flags: <defaults>
</compile_context>

<pallas_src>
import functools
import math

import jax
import jax.numpy as jnp
import numpy as np
from jax.experimental import pallas as pl
from jax.experimental.pallas import tpu as pltpu

EPS = 1e-5       # nn.InstanceNorm1d default
_LANE = 128      # TPU lane width
_SUBLANE = 8     # f32 sublane count


def _round_up(x, m):
    return (x + m - 1) // m * m


def _vmem_plan():
    """Chip-aware (tile budget, vmem_limit_bytes)."""
    try:
        phys = int(pltpu.get_tpu_info().vmem_capacity_bytes)
    except Exception:  # pragma: no cover - conservative fallback (v7x per-TC)
        phys = 64 * 1024 * 1024
    if phys >= 96 * 1024 * 1024:        # v5e / v6e (128 MiB physical)
        target_tile = 4 * 1024 * 1024
    else:                               # v7x (64 MiB physical per TC)
        target_tile = 3 * 1024 * 1024
    # live VMEM ~= 2x in + 2x out double buffers + small side inputs + temps
    vmem_limit = min(phys // 2, 5 * target_tile + (8 << 20))
    return target_tile, vmem_limit


def _choose_channel_tile(c_pad, bytes_per_channel, target_tile_bytes, batch):
    """TC == c_pad (c_pad <= 8) or a multiple of 8 dividing c_pad, sized to the
    chip's tile budget; shrunk if needed so the grid has enough steps for both
    v7x TensorCores (>= 2 required, >= 8 preferred while tiles stay >= 512 KiB)."""
    if c_pad <= _SUBLANE:
        return c_pad
    max_tc = max(_SUBLANE,
                 min(c_pad,
                     (target_tile_bytes // bytes_per_channel) // _SUBLANE * _SUBLANE))
    tc = max_tc
    while tc > _SUBLANE and c_pad % tc != 0:
        tc -= _SUBLANE

    def next_divisor_down(t):
        n = t - _SUBLANE
        while n > _SUBLANE and c_pad % n != 0:
            n -= _SUBLANE
        return n

    min_tile_bytes = 512 * 1024
    while tc > _SUBLANE:
        steps = batch * (c_pad // tc)
        if steps >= 8:
            break
        nxt = next_divisor_down(tc)
        if steps >= 2 and nxt * bytes_per_channel < min_tile_bytes:
            break
        tc = nxt
    return tc


# --------------------------- fast path (fused) ------------------------------
def _adain_fused_kernel(x_ref, gb_ref, o_ref, *, inv_l):
    """x_ref: (1, TC, L_pad); gb_ref: (1, TC, 2) = [gamma, beta]; o_ref like x.

    Zero padding along L does not perturb sum/sum-of-squares; stats divide by
    the true length via inv_l. Variance uses E[x^2] - mean^2 with f32
    accumulation (no materialized centered temporary)."""
    x = x_ref[...].astype(jnp.float32)
    gb = gb_ref[...].astype(jnp.float32)
    gamma = gb[:, :, 0:1]
    beta = gb[:, :, 1:2]

    sum_x = jnp.sum(x, axis=-1, keepdims=True)
    sum_xx = jnp.sum(x * x, axis=-1, keepdims=True)
    mean = sum_x * inv_l
    var = jnp.maximum(sum_xx * inv_l - mean * mean, 0.0)
    inv = jax.lax.rsqrt(var + EPS)

    scale = gamma * inv
    shift = beta - mean * scale
    o_ref[...] = (x * scale + shift).astype(o_ref.dtype)


# --------------------- long-L fallback (two streaming passes) ---------------
def _stats_kernel(x_ref, s_ref):
    """Accumulate [sum(x), sum(x^2)] over the L grid axis into a resident block."""
    x = x_ref[...].astype(jnp.float32)
    ps = jnp.sum(x, axis=-1, keepdims=True)
    pss = jnp.sum(x * x, axis=-1, keepdims=True)
    part = jnp.concatenate([ps, pss], axis=-1)            # (1, TC, 2)

    @pl.when(pl.program_id(2) == 0)
    def _():
        s_ref[...] = part

    @pl.when(pl.program_id(2) != 0)
    def _():
        s_ref[...] = s_ref[...] + part


def _apply_kernel(x_ref, ss_ref, o_ref):
    """Elementwise x*scale + shift; ss_ref: (1, TC, 2) = [scale, shift]."""
    x = x_ref[...].astype(jnp.float32)
    ss = ss_ref[...]
    o_ref[...] = (x * ss[:, :, 0:1] + ss[:, :, 1:2]).astype(o_ref.dtype)


# ------------------------------- wrapper -------------------------------------
def adaptive_instance_norm_1d(x, style, weight_orig, bias):
    """x: (B, C, L); style: (B, S); weight_orig: (2C, S); bias: (2C,)."""
    B, C, L = x.shape
    S = style.shape[1]

    # --- style MLP hoisted out of the kernel (EqualLR: w * sqrt(2 / fan_in)) ---
    w_scaled = weight_orig.astype(jnp.float32) * jnp.float32(math.sqrt(2.0 / S))
    st = style.astype(jnp.float32) @ w_scaled.T + bias.astype(jnp.float32)  # (B, 2C)
    gamma, beta = st[:, :C], st[:, C:]
    gb = jnp.stack([gamma, beta], axis=-1)                 # (B, C, 2) fused side input

    target_tile, vmem_limit = _vmem_plan()

    # Channel padding: keep channel tiles exact multiples of 8 (no garbage rows).
    c_pad = C if (C <= _SUBLANE or C % _SUBLANE == 0) else _round_up(C, _SUBLANE)
    pad_c = c_pad - C
    gb_p = jnp.pad(gb, ((0, 0), (0, pad_c), (0, 0))) if pad_c else gb

    # Lane-dense L (multiple of 128) so stores are full-lane vst.
    l128 = _round_up(L, _LANE)
    min_tc = c_pad if c_pad <= _SUBLANE else _SUBLANE
    fast_path = min_tc * l128 * 4 <= target_tile

    if fast_path:
        l_pad = l128
        tc = _choose_channel_tile(c_pad, l128 * 4, target_tile, B)
        kl, tl = 1, l_pad
    else:
        tc = min_tc
        max_tl = max(_LANE, (target_tile // (tc * 4)) // _LANE * _LANE)
        kl = int(pl.cdiv(L, max_tl))
        tl = _round_up(-(-L // kl), _LANE)
        l_pad = kl * tl

    pad_l = l_pad - L
    x_p = jnp.pad(x, ((0, 0), (0, pad_c), (0, pad_l))) if (pad_c or pad_l) else x

    if fast_path:
        out = pl.pallas_call(
            functools.partial(_adain_fused_kernel, inv_l=1.0 / L),
            out_shape=jax.ShapeDtypeStruct((B, c_pad, l_pad), x.dtype),
            grid=(B, c_pad // tc),
            in_specs=[
                pl.BlockSpec((1, tc, l_pad), lambda b, c: (b, c, 0)),
                pl.BlockSpec((1, tc, 2), lambda b, c: (b, c, 0)),
            ],
            out_specs=pl.BlockSpec((1, tc, l_pad), lambda b, c: (b, c, 0)),
            compiler_params=pltpu.CompilerParams(
                dimension_semantics=("parallel", "parallel"),
                vmem_limit_bytes=vmem_limit),
        )(x_p, gb_p)
    else:
        # Pass 1: per-(b, c) sum and sum-of-squares, L axis reduced in-kernel.
        stats = pl.pallas_call(
            _stats_kernel,
            out_shape=jax.ShapeDtypeStruct((B, c_pad, 2), jnp.float32),
            grid=(B, c_pad // tc, kl),
            in_specs=[pl.BlockSpec((1, tc, tl), lambda b, c, l: (b, c, l))],
            out_specs=pl.BlockSpec((1, tc, 2), lambda b, c, l: (b, c, 0)),
            compiler_params=pltpu.CompilerParams(
                dimension_semantics=("parallel", "parallel", "arbitrary"),
                vmem_limit_bytes=vmem_limit),
        )(x_p)
        # Tiny per-(b, c) scale/shift math stays in plain JAX.
        mean = stats[..., 0] / L
        var = jnp.maximum(stats[..., 1] / L - mean * mean, 0.0)
        inv = jax.lax.rsqrt(var + EPS)
        scale = gb_p[..., 0] * inv
        shift = gb_p[..., 1] - mean * scale
        ss = jnp.stack([scale, shift], axis=-1).astype(jnp.float32)   # (B, c_pad, 2)
        # Pass 2: streaming normalize + affine.
        out = pl.pallas_call(
            _apply_kernel,
            out_shape=jax.ShapeDtypeStruct((B, c_pad, l_pad), x.dtype),
            grid=(B, c_pad // tc, kl),
            in_specs=[
                pl.BlockSpec((1, tc, tl), lambda b, c, l: (b, c, l)),
                pl.BlockSpec((1, tc, 2), lambda b, c, l: (b, c, 0)),
            ],
            out_specs=pl.BlockSpec((1, tc, tl), lambda b, c, l: (b, c, l)),
            compiler_params=pltpu.CompilerParams(
                dimension_semantics=("parallel", "parallel", "parallel"),
                vmem_limit_bytes=vmem_limit),
        )(x_p, ss)

    return out[:, :C, :L]


def _reference(x, style, weight_orig, bias):
    """Pure-JAX reference mirroring the PyTorch module semantics."""
    C = x.shape[1]
    S = style.shape[1]
    w = weight_orig * jnp.float32(math.sqrt(2.0 / S))
    st = style @ w.T + bias                        # (B, 2C)
    gamma, beta = st[:, :C], st[:, C:]
    mean = x.mean(axis=-1, keepdims=True)
    var = ((x - mean) ** 2).mean(axis=-1, keepdims=True)
    xn = (x - mean) / jnp.sqrt(var + EPS)
    return gamma[:, :, None] * xn + beta[:, :, None]


if __name__ == "__main__":
    B, C, L, S = 2, 4, 16, 8   # batch, in_channel, length, style_dim

    key = jax.random.PRNGKey(0)
    kx, ks, kw = jax.random.split(key, 3)

    x = jax.random.normal(kx, (B, C, L), dtype=jnp.float32)
    style = jax.random.normal(ks, (B, S), dtype=jnp.float32)

    # Parameters mirroring the module's __init__:
    #   linear.weight.data.normal_() -> (2C, S); bias[:C]=1, bias[C:]=0.
    weight_orig = jax.random.normal(kw, (2 * C, S), dtype=jnp.float32)
    bias = jnp.concatenate(
        [jnp.ones((C,), jnp.float32), jnp.zeros((C,), jnp.float32)])

    out = adaptive_instance_norm_1d(x, style, weight_orig, bias)
    out = jax.block_until_ready(out)

    ref = _reference(x, style, weight_orig, bias)
    np.testing.assert_allclose(np.asarray(out), np.asarray(ref),
                               rtol=1e-5, atol=1e-5)

    print("KERNEL_OK")
</pallas_src>

<mosaic_0001>
module attributes {stable_mosaic.version = 11 : i64} {
  func.func @_adain_fused_kernel(%arg0: i32, %arg1: i32, %arg2: memref<1x4x128xf32, #tpu.memory_space<vmem>>, %arg3: memref<1x4x2xf32, #tpu.memory_space<vmem>>, %arg4: memref<1x4x128xf32, #tpu.memory_space<vmem>>) attributes {dimension_semantics = [#tpu.dimension_semantics<parallel>, #tpu.dimension_semantics<parallel>], iteration_bounds = array<i64: 2, 1>, scalar_prefetch = 0 : i64, scratch_operands = 0 : i64, tpu.core_type = #tpu.core_type<tc>, window_params = [{transform_indices = @transform_0, window_bounds = array<i64: 1, 4, 128>}, {transform_indices = @transform_1, window_bounds = array<i64: 1, 4, 2>}, {transform_indices = @transform_2, window_bounds = array<i64: 1, 4, 128>}]} {
    %c0 = arith.constant 0 : index
    %c0_0 = arith.constant 0 : index
    %c0_1 = arith.constant 0 : index
    %0 = vector.load %arg2[%c0, %c0_0, %c0_1] : memref<1x4x128xf32, #tpu.memory_space<vmem>>, vector<1x4x128xf32>
    %c0_2 = arith.constant 0 : index
    %c0_3 = arith.constant 0 : index
    %c0_4 = arith.constant 0 : index
    %1 = vector.load %arg3[%c0_2, %c0_3, %c0_4] : memref<1x4x2xf32, #tpu.memory_space<vmem>>, vector<1x4x2xf32>
    %2 = vector.extract_strided_slice %1 {offsets = [0, 0, 0], sizes = [1, 4, 1], strides = [1, 1, 1]} : vector<1x4x2xf32> to vector<1x4x1xf32>
    %3 = vector.extract_strided_slice %1 {offsets = [0, 0, 1], sizes = [1, 4, 1], strides = [1, 1, 1]} : vector<1x4x2xf32> to vector<1x4x1xf32>
    %cst = arith.constant dense<0.000000e+00> : vector<1x4xf32>
    %4 = vector.multi_reduction <add>, %0, %cst [2] : vector<1x4x128xf32> to vector<1x4xf32>
    %5 = vector.shape_cast %4 : vector<1x4xf32> to vector<1x4x1xf32>
    %6 = arith.mulf %0, %0 : vector<1x4x128xf32>
    %cst_5 = arith.constant dense<0.000000e+00> : vector<1x4xf32>
    %7 = vector.multi_reduction <add>, %6, %cst_5 [2] : vector<1x4x128xf32> to vector<1x4xf32>
    %8 = vector.shape_cast %7 : vector<1x4xf32> to vector<1x4x1xf32>
    %cst_6 = arith.constant 6.250000e-02 : f32
    %9 = vector.broadcast %cst_6 : f32 to vector<1x4x1xf32>
    %10 = arith.mulf %5, %9 : vector<1x4x1xf32>
    %cst_7 = arith.constant 6.250000e-02 : f32
    %11 = vector.broadcast %cst_7 : f32 to vector<1x4x1xf32>
    %12 = arith.mulf %8, %11 : vector<1x4x1xf32>
    %13 = arith.mulf %10, %10 : vector<1x4x1xf32>
    %14 = arith.subf %12, %13 : vector<1x4x1xf32>
    %cst_8 = arith.constant 0.000000e+00 : f32
    %15 = vector.broadcast %cst_8 : f32 to vector<1x4x1xf32>
    %16 = arith.maximumf %14, %15 : vector<1x4x1xf32>
    %cst_9 = arith.constant 9.99999974E-6 : f32
    %17 = vector.broadcast %cst_9 : f32 to vector<1x4x1xf32>
    %18 = arith.addf %16, %17 : vector<1x4x1xf32>
    %19 = math.rsqrt %18 : vector<1x4x1xf32>
    %20 = arith.mulf %2, %19 : vector<1x4x1xf32>
    %21 = arith.mulf %10, %20 : vector<1x4x1xf32>
    %22 = arith.subf %3, %21 : vector<1x4x1xf32>
    %23 = vector.broadcast %20 : vector<1x4x1xf32> to vector<1x4x128xf32>
    %24 = arith.mulf %0, %23 : vector<1x4x128xf32>
    %25 = vector.broadcast %22 : vector<1x4x1xf32> to vector<1x4x128xf32>
    %26 = arith.addf %24, %25 : vector<1x4x128xf32>
    %c0_10 = arith.constant 0 : index
    %c0_11 = arith.constant 0 : index
    %c0_12 = arith.constant 0 : index
    %27 = vector.load %arg4[%c0_10, %c0_11, %c0_12] : memref<1x4x128xf32, #tpu.memory_space<vmem>>, vector<1x4x128xf32>
    tpu.vector_store %arg4[%c0_10, %c0_11, %c0_12], %26 {strides = array<i32>} : memref<1x4x128xf32, #tpu.memory_space<vmem>>, vector<1x4x128xf32>,
    return
  }
  func.func @transform_0(%arg0: i32, %arg1: i32) -> (i32, i32, i32) {
    %c0_i32 = arith.constant 0 : i32
    %c0_i32_0 = arith.constant 0 : i32
    return %arg0, %arg1, %c0_i32 : i32, i32, i32
  }
  func.func @transform_1(%arg0: i32, %arg1: i32) -> (i32, i32, i32) {
    %c0_i32 = arith.constant 0 : i32
    %c0_i32_0 = arith.constant 0 : i32
    return %arg0, %arg1, %c0_i32 : i32, i32, i32
  }
  func.func @transform_2(%arg0: i32, %arg1: i32) -> (i32, i32, i32) {
    %c0_i32 = arith.constant 0 : i32
    %c0_i32_0 = arith.constant 0 : i32
    return %arg0, %arg1, %c0_i32 : i32, i32, i32
  }
}

</mosaic_0001>

<llo_original>
// kernel: tpu_custom_call.1
$region0: #{tpu_custom_call.1}
  #allocation0 [shape = 'u32[]', space=smem, size = 0x4, offset = 0x4, fixed_abs, tag = 'smem constant byte address 0x4 - core index']
  #allocation1 [shape = 'u32[144,128]{1,0:T(1,128)}', space=vmem, size = 0x12000, scoped, tag = 'internal scratch']
  %s0 = inlined_call_operand.vmem [shape: f32[2,4,128], index: 0, kind: input, shape index: {}]
  %s1 = inlined_call_operand.vmem [shape: f32[2,4,2], index: 1, kind: input, shape index: {}]
  %s2 = inlined_call_operand.hbm [shape: f32[2,4,128], index: 2, kind: output, shape index: {}]
  %s3 = sld [smem:[#allocation0]]
  $region41: #{tpu_custom_call.1} parent=0
    _
  %s5 = ssub.s32 1, %s3
  %s6 = scalar_select 0, %s5, %s3
  $region1: #{tpu_custom_call.1} parent=0
    #allocation2 [shape = 'u8[4096]{0}', space=vmem, size = 0x1000, scoped, tag = 'output window, operand 0']
    #allocation3 [shape = 's32[2]{0}', space=sflag, size = 0x8, scoped, tag = 'scoped memory for tpu_custom_call.1']
    %7 = vsyncpa [#allocation3], 0
    %s8 = scalar_lea.sflag [#allocation3], 1
    %9 = vsyncpa %s8, 0
    loop: start=0, step=1, limit=4
    $region2: #{tpu_custom_call.1} parent=1 // loop_pre_header
      _
    $region3: #{tpu_custom_call.1} parent=1 // loop_header
      %s11 = sphi 0, %s15
      %p12 = scmp.ge.s32.totalorder %s11, 4
      %s18 = sphi 0, %s30
      %s19 = sphi 0, %s26
      %s20 = sphi 0, %s18
      %s21 = sphi 0, %s19
      %s22 = sphi 0, %s20
      %s23 = sphi 0, %s21
      %s35 = sphi 0, %s37
      %s38 = sphi 0, %s35
      %s39 = sphi 0, %s38
      %s55 = sphi 0, %s39
      %s63 = sphi 0, %s65
      %s66 = sphi 0, %s63
      %s67 = sphi 0, %s66
      %s83 = sphi 0, %s67
      %s91 = sphi 0, %s93
      %s94 = sphi 0, %s91
      %s95 = sphi 0, %s94
      %s111 = sphi 0, %s95
    $region4: #{tpu_custom_call.1} parent=1 // loop_header_branch
      %14 = sbr.rel (%p12) target = $region8
    $region5: #{tpu_custom_call.1} parent=1 // loop_body
      %s16 = ssub.s32 %s11, 1
      %s17 = ssub.s32 %s11, 2
      %s24 = sadd.s32 1, %s19
      %p25 = scmp.ge.s32.totalorder %s24, 1
      %s26 = scalar_select %p25, 0, %s24
      %s27 = sadd.s32 1, %s18
      %s28 = scalar_select %p25, %s27, %s18
      %p29 = scmp.ge.s32.totalorder %s28, 2
      %s30 = scalar_select %p29, 0, %s28
      %s31 = ssub.s32 %s18, %s30
      %s32 = ssub.s32 %s19, %s26
      %s33 = sor.u32 %s31, %s32
      %p34 = scmp.eq.s32.totalorder %s33, 0
      %s36 = sadd.s32 %s35, 1
      %s37 = scalar_select %p34, %s35, %s36
      %p40 = pneg %p34
      %p41 = scmp.eq.s32.totalorder %s11, 1
      %p42 = por %p40, %p41
      %p43 = scmp.ne.s32.totalorder %s35, %s38
      %p44 = scmp.eq.s32.totalorder %s11, 0
      %p45 = por %p43, %p44
      %p46 = scmp.ne.s32.totalorder %s35, %s38
      %p47 = scmp.eq.s32.totalorder %s16, 1
      %p48 = por %p46, %p47
      %p49 = scmp.ne.s32.totalorder %s38, %s39
      %p50 = scmp.eq.s32.totalorder %s16, 0
      %p51 = por %p49, %p50
      %p52 = scmp.ne.s32.totalorder %s38, %s39
      %p53 = scmp.eq.s32.totalorder %s17, 1
      %p54 = por %p52, %p53
      %p56 = scmp.ne.s32.totalorder %s39, %s55
      %p57 = scmp.eq.s32.totalorder %s17, 0
      %p58 = por %p56, %p57
      %s59 = ssub.s32 %s18, %s30
      %s60 = ssub.s32 %s19, %s26
      %s61 = sor.u32 %s59, %s60
      %p62 = scmp.eq.s32.totalorder %s61, 0
      %s64 = sadd.s32 %s63, 1
      %s65 = scalar_select %p62, %s63, %s64
      %p68 = pneg %p62
      %p69 = scmp.eq.s32.totalorder %s11, 1
      %p70 = por %p68, %p69
      %p71 = scmp.ne.s32.totalorder %s63, %s66
      %p72 = scmp.eq.s32.totalorder %s11, 0
      %p73 = por %p71, %p72
      %p74 = scmp.ne.s32.totalorder %s63, %s66
      %p75 = scmp.eq.s32.totalorder %s16, 1
      %p76 = por %p74, %p75
      %p77 = scmp.ne.s32.totalorder %s66, %s67
      %p78 = scmp.eq.s32.totalorder %s16, 0
      %p79 = por %p77, %p78
      %p80 = scmp.ne.s32.totalorder %s66, %s67
      %p81 = scmp.eq.s32.totalorder %s17, 1
      %p82 = por %p80, %p81
      %p84 = scmp.ne.s32.totalorder %s67, %s83
      %p85 = scmp.eq.s32.totalorder %s17, 0
      %p86 = por %p84, %p85
      %s87 = ssub.s32 %s18, %s30
      %s88 = ssub.s32 %s19, %s26
      %s89 = sor.u32 %s87, %s88
      %p90 = scmp.eq.s32.totalorder %s89, 0
      %s92 = sadd.s32 %s91, 1
      %s93 = scalar_select %p90, %s91, %s92
      %p96 = pneg %p90
      %p97 = scmp.eq.s32.totalorder %s11, 1
      %p98 = por %p96, %p97
      %p99 = scmp.ne.s32.totalorder %s91, %s94
      %p100 = scmp.eq.s32.totalorder %s11, 0
      %p101 = por %p99, %p100
      %p102 = scmp.ne.s32.totalorder %s91, %s94
      %p103 = scmp.eq.s32.totalorder %s16, 1
      %p104 = por %p102, %p103
      %p105 = scmp.ne.s32.totalorder %s94, %s95
      %p106 = scmp.eq.s32.totalorder %s16, 0
      %p107 = por %p105, %p106
      %p108 = scmp.ne.s32.totalorder %s94, %s95
      %p109 = scmp.eq.s32.totalorder %s17, 1
      %p110 = por %p108, %p109
      %p112 = scmp.ne.s32.totalorder %s95, %s111
      %p113 = scmp.eq.s32.totalorder %s17, 0
      %p114 = por %p112, %p113
      %p115 = scmp.le.s32.totalorder 1, %s11
      %p116 = scmp.lt.s32.totalorder %s11, 3
      %p117 = pnand %p115, %p116
      %p118 = pneg %p117
      // Predicated region
      $region9: #{tpu_custom_call.1} parent=5 // pred_check
        _
      $region10: #{tpu_custom_call.1} parent=5 // pred_check_branch
        %120 = sbr.rel (%p117) target = $region12
      $region11: #{tpu_custom_call.1} parent=5 // pred_region
        %s121 = ssub.s32 %s11, 1
      $region12: #{tpu_custom_call.1} parent=5 // pred_fallthru
        _
      %p122 = scmp.lt.s32.totalorder %s11, 2
      // Predicated region
      $region13: #{tpu_custom_call.1} parent=5 // pred_check
        %p123 = pneg %p122
      $region14: #{tpu_custom_call.1} parent=5 // pred_check_branch
        %125 = sbr.rel (%p123) target = $region16
      $region15: #{tpu_custom_call.1} parent=5 // pred_region
        // Predicated region
        $region17: #{tpu_custom_call.1} parent=15 // pred_check
          %p126 = pneg %p45
        $region18: #{tpu_custom_call.1} parent=15 // pred_check_branch
          %128 = sbr.rel (%p126) target = $region20
        $region19: #{tpu_custom_call.1} parent=15 // pred_region
          %p129 = scmp.lt.s32.totalorder %s18, 1
          %s130 = scalar_select %p129, %s18, 1
          %p131 = scmp.lt.s32.totalorder %s19, 0
          %s132 = scalar_select %p131, %s19, 0
          %s133 = sadd.s32 %s132, %s130
          %s134 = smul.addr %s133, 4
          %s135 = scalar_lea.vmem %s0, %s134
        $region20: #{tpu_custom_call.1} parent=15 // pred_fallthru
          _
        // Predicated region
        $region21: #{tpu_custom_call.1} parent=15 // pred_check
          %p136 = pneg %p73
        $region22: #{tpu_custom_call.1} parent=15 // pred_check_branch
          %138 = sbr.rel (%p136) target = $region24
        $region23: #{tpu_custom_call.1} parent=15 // pred_region
          %p139 = scmp.lt.s32.totalorder %s18, 1
          %s140 = scalar_select %p139, %s18, 1
          %p141 = scmp.lt.s32.totalorder %s19, 0
          %s142 = scalar_select %p141, %s19, 0
          %s143 = sadd.s32 %s142, %s140
          %s144 = smul.addr %s143, 4
          %s145 = scalar_lea.vmem %s1, %s144
        $region24: #{tpu_custom_call.1} parent=15 // pred_fallthru
          _
      $region16: #{tpu_custom_call.1} parent=5 // pred_fallthru
        _
      %p146 = scmp.le.s32.totalorder 1, %s11
      %p147 = scmp.lt.s32.totalorder %s11, 3
      %p148 = pnand %p146, %p147
      %p149 = pneg %p148
      // Predicated region
      $region25: #{tpu_custom_call.1} parent=5 // pred_check
        _
      $region26: #{tpu_custom_call.1} parent=5 // pred_check_branch
        %151 = sbr.rel (%p148) target = $region28
      $region27: #{tpu_custom_call.1} parent=5 // pred_region
        %s152 = ssub.s32 %s11, 1
        %p153 = scmp.lt.s32.totalorder %s20, 1
        %s154 = scalar_select %p153, %s20, 1
        %p155 = scmp.lt.s32.totalorder %s21, 0
        %s156 = scalar_select %p155, %s21, 0
        %s157 = sadd.s32 %s156, %s154
        %s158 = smul.addr %s157, 4
        %s159 = scalar_lea.vmem %s0, %s158
        %p160 = pneg %p51
        %p161 = pneg %p48
        %p162 = scmp.lt.s32.totalorder %s20, 1
        %s163 = scalar_select %p162, %s20, 1
        %p164 = scmp.lt.s32.totalorder %s21, 0
        %s165 = scalar_select %p164, %s21, 0
        %s166 = sadd.s32 %s165, %s163
        %s167 = smul.addr %s166, 4
        %s168 = scalar_lea.vmem %s1, %s167
        %p169 = pneg %p79
        %p170 = pneg %p76
        %p171 = pneg %p107
        %p172 = pneg %p104
        %s173 = sand.u32 %s94, 1
        %s174 = scalar_lea.sflag [#allocation3], %s173
        %s175 = sand.u32 %s94, 1
        %s176 = smul.addr %s175, 4
        %s177 = scalar_lea.vmem [#allocation2], %s176
        %p178 = scmp.lt.s32.totalorder %s20, 1
        %s179 = scalar_select %p178, %s20, 1
        %p180 = scmp.lt.s32.totalorder %s21, 0
        %s181 = scalar_select %p180, %s21, 0
        %s182 = sadd.s32 %s181, %s179
        %s183 = smul.addr %s182, 4
        %s184 = scalar_lea.vmem %s0, %s183
        %p185 = scmp.lt.s32.totalorder %s20, 1
        %s186 = scalar_select %p185, %s20, 1
        %p187 = scmp.lt.s32.totalorder %s21, 0
        %s188 = scalar_select %p187, %s21, 0
        %s189 = sadd.s32 %s188, %s186
        %s190 = smul.addr %s189, 4
        %s191 = scalar_lea.vmem %s1, %s190
        %v192 = vld [vmem:[%s184] sm:$0xf]
        %v193 = vld [vmem:[%s191] sm:$0xf]
        %vm194 = vcmask 1043456
        %v195 = vsel %vm194, %v192, 0.0
        %196 = vadd.xlane.f32.xlu0 %v195
        %v197 = vpop.xlane.xlu0 %196
        %v198 = vmul.f32 %v192, %v192
        %v199 = vsel %vm194, %v198, 0.0
        %200 = vadd.xlane.f32.xlu0 %v199
        %v201 = vpop.xlane.xlu0 %200
        %v202 = vmul.f32 %v197, 0.0625
        %v203 = vmul.f32 %v201, 0.0625
        %v204 = vmul.f32 %v202, %v202
        %v205 = vsub.f32 %v203, %v204
        %v206 = vmax.f32 %v205, 0.0
        %v207 = vadd.f32 %v206, 1e-05
        %v208 = vrsqrt.pop %v207
        %v209 = vmul.f32 %v193, %v208
        %v210 = vmul.f32 %v202, %v209
        %212 = vrot.lane.b32.xlu0 %v210, 1
        %v213 = vpop.permute.xlu0 %212
        %v215 = vsub.f32 %v193, %v213
        %217 = vset.pattern.permute.xlu0 0
        %218 = vperm.xlu0 %217, %v209
        %v219 = vpop.permute.xlu0 %218
        %v221 = vmul.f32 %v192, %v219
        %223 = vset.pattern.permute.xlu0 1
        %224 = vperm.xlu0 %223, %v215
        %v225 = vpop.permute.xlu0 %224
        %v227 = vadd.f32 %v221, %v225
        %228 = vst [vmem:[%s177] sm:$0xf] %v227
        %s229 = sand.u32 %s94, 1
        %s230 = scalar_lea.sflag [#allocation3], %s229
        %s231 = sand.u32 %s94, 1
        %s232 = smul.addr %s231, 4
        %s233 = scalar_lea.vmem [#allocation2], %s232
        // Predicated region
        $region29: #{tpu_custom_call.1} parent=27 // pred_check
          %p234 = pneg %p104
        $region30: #{tpu_custom_call.1} parent=27 // pred_check_branch
          %236 = sbr.rel (%p234) target = $region32
        $region31: #{tpu_custom_call.1} parent=27 // pred_region
          %s238 = ssub.s32 64, 64
          %239 = vsyncadd %s230, %s238
          %s240 = sadd.s32 %s21, %s20
          %s241 = smul.addr %s240, 64
          %s242 = scalar_lea.hbm %s2, %s241
          %s244 = sshll.u32 %s233, 4
          %s245 = int_to_ptr.vmem [resolvable:$true] %s244
          %247 = dma.vmem_to_hbm [thread:$0]  %s245, 64, %s242, %s230
        $region32: #{tpu_custom_call.1} parent=27 // pred_fallthru
          _
      $region28: #{tpu_custom_call.1} parent=5 // pred_fallthru
        _
      %p248 = scmp.le.s32.totalorder 2, %s11
      // Predicated region
      $region33: #{tpu_custom_call.1} parent=5 // pred_check
        %p249 = pneg %p248
      $region34: #{tpu_custom_call.1} parent=5 // pred_check_branch
        %251 = sbr.rel (%p249) target = $region36
      $region35: #{tpu_custom_call.1} parent=5 // pred_region
        %s252 = ssub.s32 %s11, 2
        // Predicated region
        $region37: #{tpu_custom_call.1} parent=35 // pred_check
          %p253 = pneg %p110
        $region38: #{tpu_custom_call.1} parent=35 // pred_check_branch
          %255 = sbr.rel (%p253) target = $region40
        $region39: #{tpu_custom_call.1} parent=35 // pred_region
          %s256 = sand.u32 %s95, 1
          %s257 = scalar_lea.sflag [#allocation3], %s256
          %s258 = sand.u32 %s95, 1
          %s259 = smul.addr %s258, 4
          %s260 = scalar_lea.vmem [#allocation2], %s259
          %261 = dma.done %s257, 64
        $region40: #{tpu_custom_call.1} parent=35 // pred_fallthru
          _
      $region36: #{tpu_custom_call.1} parent=5 // pred_fallthru
        _
    $region6: #{tpu_custom_call.1} parent=1 // loop_footer
      %s15 = sadd.s32 1, %s11
    $region7: #{tpu_custom_call.1} parent=1 // loop_footer_branch
      %10 = sbr.rel target = $region3
    $region8: #{tpu_custom_call.1} parent=1 // loop_exit
      _
    %262 = vsyncpa [#allocation3], 1
    %s263 = scalar_lea.sflag [#allocation3], 1
    %264 = vsyncpa %s263, 1

</llo_original>
